<compile_context>
chip_gen: v7x
topology: tpu7x:2x2x1
jax: 0.10.0
libtpu: 0.0.40
codegen_flags: <defaults>
</compile_context>

<pallas_src>
import numpy as np
import jax
import jax.numpy as jnp
from jax import lax
from jax.experimental import pallas as pl
from jax.experimental.pallas import tpu as pltpu


def _toeplitz_conv(w, L_in, stride, pad):
    """Dense T s.t. flat_out = T @ flat_in implements Conv1d(w, stride, pad).

    flat_in index  = c_in * L_in  + i
    flat_out index = c_out * L_out + o
    T[co*L_out + o, ci*L_in + i] = w[co, ci, k]  where  i = stride*o + k - pad
    (out-of-range i == zero padding -> entry stays 0).
    """
    w = np.asarray(w, dtype=np.float32)
    c_out, c_in, K = w.shape
    L_out = (L_in + 2 * pad - K) // stride + 1
    T = np.zeros((c_out * L_out, c_in * L_in), dtype=np.float32)
    for o in range(L_out):
        for k in range(K):
            i = stride * o + k - pad
            if 0 <= i < L_in:
                T[o::L_out, i::L_in] = w[:, :, k]   # all (c_out, c_in) at once
    return T, L_out


def _kpi_ratio_kernel(x_ref, w1_ref, w2_ref, w3_ref, w4_ref, w5_ref, out_ref):
    h = x_ref[...]                                           # (2W, TB)   bf16
    for w_ref in (w1_ref, w2_ref, w3_ref, w4_ref):           # static unroll (4)
        y = jnp.dot(w_ref[...], h, preferred_element_type=jnp.float32)
        h = jnp.maximum(y, 0.0).astype(jnp.bfloat16)         # relu, bf16 for MXU
    y = jnp.dot(w5_ref[...], h, preferred_element_type=jnp.float32)   # (1, TB)
    out_ref[...] = jax.nn.sigmoid(y).astype(out_ref.dtype)   # lane-dense store


def make_kpi_ratio(params, window, batch_tile=256):
    """Preprocess the conv weights into per-layer Toeplitz matmuls (done once);
    return a jitted forward(x1, x2) -> (B,) function."""
    assert window % 12 == 0, "KPI_Ratio requires window divisible by 12"
    w1, w2, w3, w4, w5 = params
    TB = int(batch_tile)
    assert TB % 128 == 0, "batch tile must be lane-dense (multiple of 128)"
    W = window

    t1, L1 = _toeplitz_conv(w1, W, 2, 1)        # (nc*W/2 , 2*W     )
    t2, L2 = _toeplitz_conv(w2, L1, 2, 1)       # (2nc*W/4, nc*W/2  )
    t3, L3 = _toeplitz_conv(w3, L2, 3, 1)       # (3nc*W/12, 2nc*W/4)
    t4, L4 = _toeplitz_conv(w4, L3, 1, 0)       # (4nc     , 3nc*W/12)
    assert L4 == 1, "conv4 is expected to collapse the temporal axis"
    t5 = np.asarray(w5, np.float32)[:, :, 0]    # (1, 4nc)   1x1 conv

    wts = tuple(jnp.asarray(t, dtype=jnp.bfloat16) for t in (t1, t2, t3, t4, t5))

    def full(a):
        n = a.ndim
        return pl.BlockSpec(a.shape, lambda t, _n=n: (0,) * _n)

    flops_per_col = 2 * sum(int(t.shape[0]) * int(t.shape[1]) for t in wts)
    weight_bytes = sum(int(t.size) * 2 for t in wts)

    @jax.jit
    def forward(x1, x2):
        B = x1.shape[0]
        n_tiles = -(-B // TB)
        B_pad = n_tiles * TB

        # (B,1,W) x 2 -> (B, 2W) with channel 0 = x1, channel 1 = x2 (matches
        # torch.cat dim=1 and the Toeplitz column order c*W + i), then pad the
        # batch and move it to the lane dimension: (2W, B_pad).
        xf = jnp.concatenate([x1.reshape(B, W), x2.reshape(B, W)], axis=1)
        xf = jnp.pad(xf, ((0, B_pad - B), (0, 0))).astype(jnp.bfloat16)
        x = jnp.transpose(xf)                                 # (2W, B_pad)

        cost = pl.CostEstimate(
            flops=flops_per_col * B_pad,
            transcendentals=B_pad,                            # sigmoid exp
            bytes_accessed=2 * W * B_pad * 2 + B_pad * 4 + weight_bytes)

        out = pl.pallas_call(
            _kpi_ratio_kernel,
            out_shape=jax.ShapeDtypeStruct((1, B_pad), jnp.float32),
            grid=(n_tiles,),
            in_specs=[pl.BlockSpec((2 * W, TB), lambda t: (0, t))]
                     + [full(t) for t in wts],
            out_specs=pl.BlockSpec((1, TB), lambda t: (0, t)),
            compiler_params=pltpu.CompilerParams(
                dimension_semantics=("parallel",)),           # batch tiles indep.
            cost_estimate=cost,
        )(x, *wts)

        # (1, B_pad) -> (B,) ; matches torch .squeeze() (padded rows dropped)
        return out[0, :B]

    return forward


def _ref_forward(x1, x2, params):
    """Pure-JAX reference (lax conv) replicating the PyTorch module."""
    w1, w2, w3, w4, w5 = params
    x = jnp.concatenate([x1, x2], axis=1)
    dn = ('NCH', 'OIH', 'NCH')

    def conv(h, w, s, p):
        return lax.conv_general_dilated(h, w, (s,), [(p, p)], dimension_numbers=dn)

    h = jax.nn.relu(conv(x, w1, 2, 1))
    h = jax.nn.relu(conv(h, w2, 2, 1))
    h = jax.nn.relu(conv(h, w3, 3, 1))
    h = jax.nn.relu(conv(h, w4, 1, 0))
    return jnp.squeeze(jax.nn.sigmoid(conv(h, w5, 1, 0)))


if __name__ == "__main__":
    window, ratio_nc = 48, 4
    B, TB = 260, 128          # 3 batch tiles: two full + one partially padded
    nc = ratio_nc

    key = jax.random.PRNGKey(0)
    ks = jax.random.split(key, 7)
    x1 = jax.random.normal(ks[0], (B, 1, window), jnp.float32)
    x2 = jax.random.normal(ks[1], (B, 1, window), jnp.float32)

    def init_w(k, c_out, c_in, ksz):
        fan_in = c_in * ksz
        return (jax.random.normal(k, (c_out, c_in, ksz), jnp.float32)
                * np.sqrt(2.0 / fan_in)).astype(jnp.float32)

    w1 = init_w(ks[2], nc, 2, 4)
    w2 = init_w(ks[3], 2 * nc, nc, 4)
    w3 = init_w(ks[4], 3 * nc, 2 * nc, 5)
    w4 = init_w(ks[5], 4 * nc, 3 * nc, window // 12)
    w5 = init_w(ks[6], 1, 4 * nc, 1)
    params = (w1, w2, w3, w4, w5)

    forward = make_kpi_ratio(params, window, batch_tile=TB)
    out = jax.block_until_ready(forward(x1, x2))

    # reference uses the same bf16-rounded operands (kernel runs bf16 / f32-accum)
    to_bf = lambda a: a.astype(jnp.bfloat16).astype(jnp.float32)
    ref = _ref_forward(to_bf(x1), to_bf(x2), tuple(to_bf(w) for w in params))

    assert out.shape == (B,)
    np.testing.assert_allclose(np.asarray(out), np.asarray(ref),
                               rtol=2e-2, atol=1e-2)
    print("KERNEL_OK")
</pallas_src>

<mosaic_0001>
module attributes {stable_mosaic.version = 11 : i64} {
  func.func @_kpi_ratio_kernel(%arg0: i32, %arg1: memref<96x128xbf16, #tpu.memory_space<vmem>>, %arg2: memref<96x96xbf16, #tpu.memory_space<vmem>>, %arg3: memref<96x96xbf16, #tpu.memory_space<vmem>>, %arg4: memref<48x96xbf16, #tpu.memory_space<vmem>>, %arg5: memref<16x48xbf16, #tpu.memory_space<vmem>>, %arg6: memref<1x16xbf16, #tpu.memory_space<vmem>>, %arg7: memref<1x128xf32, #tpu.memory_space<vmem>>) attributes {dimension_semantics = [#tpu.dimension_semantics<parallel>], iteration_bounds = array<i64: 3>, scalar_prefetch = 0 : i64, scratch_operands = 0 : i64, tpu.core_type = #tpu.core_type<tc>, window_params = [{transform_indices = @transform_0, window_bounds = array<i64: 96, 128>}, {pipeline_mode = #tpu.pipeline_mode<synchronous>, transform_indices = @transform_1, window_bounds = array<i64: 96, 96>}, {pipeline_mode = #tpu.pipeline_mode<synchronous>, transform_indices = @transform_2, window_bounds = array<i64: 96, 96>}, {pipeline_mode = #tpu.pipeline_mode<synchronous>, transform_indices = @transform_3, window_bounds = array<i64: 48, 96>}, {pipeline_mode = #tpu.pipeline_mode<synchronous>, transform_indices = @transform_4, window_bounds = array<i64: 16, 48>}, {pipeline_mode = #tpu.pipeline_mode<synchronous>, transform_indices = @transform_5, window_bounds = array<i64: 1, 16>}, {transform_indices = @transform_6, window_bounds = array<i64: 1, 128>}]} {
    %c0 = arith.constant 0 : index
    %c0_0 = arith.constant 0 : index
    %0 = vector.load %arg1[%c0, %c0_0] : memref<96x128xbf16, #tpu.memory_space<vmem>>, vector<96x128xbf16>
    %c0_1 = arith.constant 0 : index
    %c0_2 = arith.constant 0 : index
    %1 = vector.load %arg2[%c0_1, %c0_2] : memref<96x96xbf16, #tpu.memory_space<vmem>>, vector<96x96xbf16>
    %cst = arith.constant dense<0.000000e+00> : vector<96x128xf32>
    %2 = tpu.matmul %1, %0, %cst {dimension_numbers = #tpu.dot_dimension_numbers<[1], [0], [0], [1], [0, 0, 1, 1], [], []>} : vector<96x96xbf16>, vector<96x128xbf16>, vector<96x128xf32> -> vector<96x128xf32>
    %cst_3 = arith.constant 0.000000e+00 : f32
    %3 = vector.broadcast %cst_3 : f32 to vector<96x128xf32>
    %4 = arith.maximumf %2, %3 : vector<96x128xf32>
    %5 = arith.truncf %4 : vector<96x128xf32> to vector<96x128xbf16>
    %c0_4 = arith.constant 0 : index
    %c0_5 = arith.constant 0 : index
    %6 = vector.load %arg3[%c0_4, %c0_5] : memref<96x96xbf16, #tpu.memory_space<vmem>>, vector<96x96xbf16>
    %cst_6 = arith.constant dense<0.000000e+00> : vector<96x128xf32>
    %7 = tpu.matmul %6, %5, %cst_6 {dimension_numbers = #tpu.dot_dimension_numbers<[1], [0], [0], [1], [0, 0, 1, 1], [], []>} : vector<96x96xbf16>, vector<96x128xbf16>, vector<96x128xf32> -> vector<96x128xf32>
    %cst_7 = arith.constant 0.000000e+00 : f32
    %8 = vector.broadcast %cst_7 : f32 to vector<96x128xf32>
    %9 = arith.maximumf %7, %8 : vector<96x128xf32>
    %10 = arith.truncf %9 : vector<96x128xf32> to vector<96x128xbf16>
    %c0_8 = arith.constant 0 : index
    %c0_9 = arith.constant 0 : index
    %11 = vector.load %arg4[%c0_8, %c0_9] : memref<48x96xbf16, #tpu.memory_space<vmem>>, vector<48x96xbf16>
    %cst_10 = arith.constant dense<0.000000e+00> : vector<48x128xf32>
    %12 = tpu.matmul %11, %10, %cst_10 {dimension_numbers = #tpu.dot_dimension_numbers<[1], [0], [0], [1], [0, 0, 1, 1], [], []>} : vector<48x96xbf16>, vector<96x128xbf16>, vector<48x128xf32> -> vector<48x128xf32>
    %cst_11 = arith.constant 0.000000e+00 : f32
    %13 = vector.broadcast %cst_11 : f32 to vector<48x128xf32>
    %14 = arith.maximumf %12, %13 : vector<48x128xf32>
    %15 = arith.truncf %14 : vector<48x128xf32> to vector<48x128xbf16>
    %c0_12 = arith.constant 0 : index
    %c0_13 = arith.constant 0 : index
    %16 = vector.load %arg5[%c0_12, %c0_13] : memref<16x48xbf16, #tpu.memory_space<vmem>>, vector<16x48xbf16>
    %cst_14 = arith.constant dense<0.000000e+00> : vector<16x128xf32>
    %17 = tpu.matmul %16, %15, %cst_14 {dimension_numbers = #tpu.dot_dimension_numbers<[1], [0], [0], [1], [0, 0, 1, 1], [], []>} : vector<16x48xbf16>, vector<48x128xbf16>, vector<16x128xf32> -> vector<16x128xf32>
    %cst_15 = arith.constant 0.000000e+00 : f32
    %18 = vector.broadcast %cst_15 : f32 to vector<16x128xf32>
    %19 = arith.maximumf %17, %18 : vector<16x128xf32>
    %20 = arith.truncf %19 : vector<16x128xf32> to vector<16x128xbf16>
    %c0_16 = arith.constant 0 : index
    %c0_17 = arith.constant 0 : index
    %21 = vector.load %arg6[%c0_16, %c0_17] : memref<1x16xbf16, #tpu.memory_space<vmem>>, vector<1x16xbf16>
    %cst_18 = arith.constant dense<0.000000e+00> : vector<1x128xf32>
    %22 = tpu.matmul %21, %20, %cst_18 {dimension_numbers = #tpu.dot_dimension_numbers<[1], [0], [0], [1], [0, 0, 1, 1], [], []>} : vector<1x16xbf16>, vector<16x128xbf16>, vector<1x128xf32> -> vector<1x128xf32>
    %23 = arith.negf %22 : vector<1x128xf32>
    %24 = math.exp %23 : vector<1x128xf32>
    %cst_19 = arith.constant 1.000000e+00 : f32
    %25 = vector.broadcast %cst_19 : f32 to vector<1x128xf32>
    %26 = arith.addf %25, %24 : vector<1x128xf32>
    %27 = arith.divf %25, %26 : vector<1x128xf32>
    %c0_20 = arith.constant 0 : index
    %c0_21 = arith.constant 0 : index
    %28 = vector.load %arg7[%c0_20, %c0_21] : memref<1x128xf32, #tpu.memory_space<vmem>>, vector<1x128xf32>
    tpu.vector_store %arg7[%c0_20, %c0_21], %27 {strides = array<i32>} : memref<1x128xf32, #tpu.memory_space<vmem>>, vector<1x128xf32>,
    return
  }
  func.func @transform_0(%arg0: i32) -> (i32, i32) {
    %c0_i32 = arith.constant 0 : i32
    %c0_i32_0 = arith.constant 0 : i32
    return %c0_i32, %arg0 : i32, i32
  }
  func.func @transform_1(%arg0: i32) -> (i32, i32) {
    %c0_i32 = arith.constant 0 : i32
    %c0_i32_0 = arith.constant 0 : i32
    %c0_i32_1 = arith.constant 0 : i32
    return %c0_i32, %c0_i32_0 : i32, i32
  }
  func.func @transform_2(%arg0: i32) -> (i32, i32) {
    %c0_i32 = arith.constant 0 : i32
    %c0_i32_0 = arith.constant 0 : i32
    %c0_i32_1 = arith.constant 0 : i32
    return %c0_i32, %c0_i32_0 : i32, i32
  }
  func.func @transform_3(%arg0: i32) -> (i32, i32) {
    %c0_i32 = arith.constant 0 : i32
    %c0_i32_0 = arith.constant 0 : i32
    %c0_i32_1 = arith.constant 0 : i32
    return %c0_i32, %c0_i32_0 : i32, i32
  }
  func.func @transform_4(%arg0: i32) -> (i32, i32) {
    %c0_i32 = arith.constant 0 : i32
    %c0_i32_0 = arith.constant 0 : i32
    %c0_i32_1 = arith.constant 0 : i32
    return %c0_i32, %c0_i32_0 : i32, i32
  }
  func.func @transform_5(%arg0: i32) -> (i32, i32) {
    %c0_i32 = arith.constant 0 : i32
    %c0_i32_0 = arith.constant 0 : i32
    %c0_i32_1 = arith.constant 0 : i32
    return %c0_i32, %c0_i32_0 : i32, i32
  }
  func.func @transform_6(%arg0: i32) -> (i32, i32) {
    %c0_i32 = arith.constant 0 : i32
    %c0_i32_0 = arith.constant 0 : i32
    return %c0_i32, %arg0 : i32, i32
  }
}

</mosaic_0001>

<llo_original>
// kernel: forward.1
$region0: #{forward.1}
  #allocation0 [shape = 'u32[]', space=smem, size = 0x4, offset = 0x4, fixed_abs, tag = 'smem constant byte address 0x4 - core index']
  #allocation1 [shape = 'u32[144,128]{1,0:T(1,128)}', space=vmem, size = 0x12000, scoped, tag = 'internal scratch']
  %s0 = inlined_call_operand.vmem [shape: bf16[96,384], index: 0, kind: input, shape index: {}]
  %s1 = inlined_call_operand.vmem [shape: bf16[96,96], index: 1, kind: input, shape index: {}]
  %s2 = inlined_call_operand.vmem [shape: bf16[96,96], index: 2, kind: input, shape index: {}]
  %s3 = inlined_call_operand.vmem [shape: bf16[48,96], index: 3, kind: input, shape index: {}]
  %s4 = inlined_call_operand.vmem [shape: bf16[16,48], index: 4, kind: input, shape index: {}]
  %s5 = inlined_call_operand.vmem [shape: bf16[1,16], index: 5, kind: input, shape index: {}]
  %s6 = inlined_call_operand.vmem [shape: f32[1,384], index: 6, kind: output, shape index: {}]
  %s7 = sld [smem:[#allocation0]]
  $region98: #{forward.1} parent=0
    _
  %s9 = ssub.s32 1, %s7
  %s10 = scalar_select 0, %s9, %s7
  $region1: #{forward.1} parent=0
    #allocation2 [shape = 'u8[49152]{0}', space=vmem, size = 0xc000, scoped, tag = 'input window, operand 0']
    loop: start=0, step=1, limit=5
    $region2: #{forward.1} parent=1 // loop_pre_header
      _
    $region3: #{forward.1} parent=1 // loop_header
      %s12 = sphi 0, %s16
      %p13 = scmp.ge.s32.totalorder %s12, 5
      %s22 = sphi 0, %s24
      %s25 = sphi 0, %s22
      %s26 = sphi 0, %s25
      %s42 = sphi 0, %s26
      %s46 = sphi 0, %s46
      %s48 = sphi 0, %s46
      %s49 = sphi 0, %s48
      %s63 = sphi 0, %s49
      %s67 = sphi 0, %s67
      %s69 = sphi 0, %s67
      %s70 = sphi 0, %s69
      %s84 = sphi 0, %s70
      %s88 = sphi 0, %s88
      %s90 = sphi 0, %s88
      %s91 = sphi 0, %s90
      %s105 = sphi 0, %s91
      %s109 = sphi 0, %s109
      %s111 = sphi 0, %s109
      %s112 = sphi 0, %s111
      %s126 = sphi 0, %s112
      %s130 = sphi 0, %s130
      %s132 = sphi 0, %s130
      %s133 = sphi 0, %s132
      %s147 = sphi 0, %s133
      %s153 = sphi 0, %s155
      %s156 = sphi 0, %s153
      %s157 = sphi 0, %s156
      %s173 = sphi 0, %s157
    $region4: #{forward.1} parent=1 // loop_header_branch
      %15 = sbr.rel (%p13) target = $region8
    $region5: #{forward.1} parent=1 // loop_body
      %s17 = ssub.s32 %s12, 1
      %s18 = ssub.s32 %s12, 2
      %s19 = sadd.s32 %s12, 1
      %s20 = ssub.s32 %s12, %s19
      %p21 = scmp.eq.s32.totalorder %s20, 0
      %s23 = sadd.s32 %s22, 1
      %s24 = scalar_select %p21, %s22, %s23
      %p27 = pneg %p21
      %p28 = scmp.eq.s32.totalorder %s12, 2
      %p29 = por %p27, %p28
      %p30 = scmp.ne.s32.totalorder %s22, %s25
      %p31 = scmp.eq.s32.totalorder %s12, 0
      %p32 = por %p30, %p31
      %p33 = scmp.ne.s32.totalorder %s22, %s25
      %p34 = scmp.eq.s32.totalorder %s17, 2
      %p35 = por %p33, %p34
      %p36 = scmp.ne.s32.totalorder %s25, %s26
      %p37 = scmp.eq.s32.totalorder %s17, 0
      %p38 = por %p36, %p37
      %p39 = scmp.ne.s32.totalorder %s25, %s26
      %p40 = scmp.eq.s32.totalorder %s18, 2
      %p41 = por %p39, %p40
      %p43 = scmp.ne.s32.totalorder %s26, %s42
      %p44 = scmp.eq.s32.totalorder %s18, 0
      %p45 = por %p43, %p44
      %s47 = sadd.s32 %s46, 1
      %p50 = scmp.eq.s32.totalorder %s12, 2
      %p51 = scmp.ne.s32.totalorder %s46, %s48
      %p52 = scmp.eq.s32.totalorder %s12, 0
      %p53 = por %p51, %p52
      %p54 = scmp.ne.s32.totalorder %s46, %s48
      %p55 = scmp.eq.s32.totalorder %s17, 2
      %p56 = por %p54, %p55
      %p57 = scmp.ne.s32.totalorder %s48, %s49
      %p58 = scmp.eq.s32.totalorder %s17, 0
      %p59 = por %p57, %p58
      %p60 = scmp.ne.s32.totalorder %s48, %s49
      %p61 = scmp.eq.s32.totalorder %s18, 2
      %p62 = por %p60, %p61
      %p64 = scmp.ne.s32.totalorder %s49, %s63
      %p65 = scmp.eq.s32.totalorder %s18, 0
      %p66 = por %p64, %p65
      %s68 = sadd.s32 %s67, 1
      %p71 = scmp.eq.s32.totalorder %s12, 2
      %p72 = scmp.ne.s32.totalorder %s67, %s69
      %p73 = scmp.eq.s32.totalorder %s12, 0
      %p74 = por %p72, %p73
      %p75 = scmp.ne.s32.totalorder %s67, %s69
      %p76 = scmp.eq.s32.totalorder %s17, 2
      %p77 = por %p75, %p76
      %p78 = scmp.ne.s32.totalorder %s69, %s70
      %p79 = scmp.eq.s32.totalorder %s17, 0
      %p80 = por %p78, %p79
      %p81 = scmp.ne.s32.totalorder %s69, %s70
      %p82 = scmp.eq.s32.totalorder %s18, 2
      %p83 = por %p81, %p82
      %p85 = scmp.ne.s32.totalorder %s70, %s84
      %p86 = scmp.eq.s32.totalorder %s18, 0
      %p87 = por %p85, %p86
      %s89 = sadd.s32 %s88, 1
      %p92 = scmp.eq.s32.totalorder %s12, 2
      %p93 = scmp.ne.s32.totalorder %s88, %s90
      %p94 = scmp.eq.s32.totalorder %s12, 0
      %p95 = por %p93, %p94
      %p96 = scmp.ne.s32.totalorder %s88, %s90
      %p97 = scmp.eq.s32.totalorder %s17, 2
      %p98 = por %p96, %p97
      %p99 = scmp.ne.s32.totalorder %s90, %s91
      %p100 = scmp.eq.s32.totalorder %s17, 0
      %p101 = por %p99, %p100
      %p102 = scmp.ne.s32.totalorder %s90, %s91
      %p103 = scmp.eq.s32.totalorder %s18, 2
      %p104 = por %p102, %p103
      %p106 = scmp.ne.s32.totalorder %s91, %s105
      %p107 = scmp.eq.s32.totalorder %s18, 0
      %p108 = por %p106, %p107
      %s110 = sadd.s32 %s109, 1
      %p113 = scmp.eq.s32.totalorder %s12, 2
      %p114 = scmp.ne.s32.totalorder %s109, %s111
      %p115 = scmp.eq.s32.totalorder %s12, 0
      %p116 = por %p114, %p115
      %p117 = scmp.ne.s32.totalorder %s109, %s111
      %p118 = scmp.eq.s32.totalorder %s17, 2
      %p119 = por %p117, %p118
      %p120 = scmp.ne.s32.totalorder %s111, %s112
      %p121 = scmp.eq.s32.totalorder %s17, 0
      %p122 = por %p120, %p121
      %p123 = scmp.ne.s32.totalorder %s111, %s112
      %p124 = scmp.eq.s32.totalorder %s18, 2
      %p125 = por %p123, %p124
      %p127 = scmp.ne.s32.totalorder %s112, %s126
      %p128 = scmp.eq.s32.totalorder %s18, 0
      %p129 = por %p127, %p128
      %s131 = sadd.s32 %s130, 1
      %p134 = scmp.eq.s32.totalorder %s12, 2
      %p135 = scmp.ne.s32.totalorder %s130, %s132
      %p136 = scmp.eq.s32.totalorder %s12, 0
      %p137 = por %p135, %p136
      %p138 = scmp.ne.s32.totalorder %s130, %s132
      %p139 = scmp.eq.s32.totalorder %s17, 2
      %p140 = por %p138, %p139
      %p141 = scmp.ne.s32.totalorder %s132, %s133
      %p142 = scmp.eq.s32.totalorder %s17, 0
      %p143 = por %p141, %p142
      %p144 = scmp.ne.s32.totalorder %s132, %s133
      %p145 = scmp.eq.s32.totalorder %s18, 2
      %p146 = por %p144, %p145
      %p148 = scmp.ne.s32.totalorder %s133, %s147
      %p149 = scmp.eq.s32.totalorder %s18, 0
      %p150 = por %p148, %p149
      %s151 = ssub.s32 %s12, %s19
      %p152 = scmp.eq.s32.totalorder %s151, 0
      %s154 = sadd.s32 %s153, 1
      %s155 = scalar_select %p152, %s153, %s154
      %p158 = pneg %p152
      %p159 = scmp.eq.s32.totalorder %s12, 2
      %p160 = por %p158, %p159
      %p161 = scmp.ne.s32.totalorder %s153, %s156
      %p162 = scmp.eq.s32.totalorder %s12, 0
      %p163 = por %p161, %p162
      %p164 = scmp.ne.s32.totalorder %s153, %s156
      %p165 = scmp.eq.s32.totalorder %s17, 2
      %p166 = por %p164, %p165
      %p167 = scmp.ne.s32.totalorder %s156, %s157
      %p168 = scmp.eq.s32.totalorder %s17, 0
      %p169 = por %p167, %p168
      %p170 = scmp.ne.s32.totalorder %s156, %s157
      %p171 = scmp.eq.s32.totalorder %s18, 2
      %p172 = por %p170, %p171
      %p174 = scmp.ne.s32.totalorder %s157, %s173
      %p175 = scmp.eq.s32.totalorder %s18, 0
      %p176 = por %p174, %p175
      %p177 = scmp.le.s32.totalorder 1, %s12
      %p178 = scmp.lt.s32.totalorder %s12, 4
      %p179 = pnand %p177, %p178
      %p180 = pneg %p179
      // Predicated region
      $region9: #{forward.1} parent=5 // pred_check
        _
      $region10: #{forward.1} parent=5 // pred_check_branch
        %182 = sbr.rel (%p179) target = $region12
      $region11: #{forward.1} parent=5 // pred_region
        %s183 = ssub.s32 %s12, 1
        // Predicated region
        $region13: #{forward.1} parent=11 // pred_check
          %p184 = pneg %p59
        $region14: #{forward.1} parent=11 // pred_check_branch
          %186 = sbr.rel (%p184) target = $region16
        $region15: #{forward.1} parent=11 // pred_region
          _
        $region16: #{forward.1} parent=11 // pred_fallthru
          _
        // Predicated region
        $region17: #{forward.1} parent=11 // pred_check
          %p187 = pneg %p80
        $region18: #{forward.1} parent=11 // pred_check_branch
          %189 = sbr.rel (%p187) target = $region20
        $region19: #{forward.1} parent=11 // pred_region
          _
        $region20: #{forward.1} parent=11 // pred_fallthru
          _
        // Predicated region
        $region21: #{forward.1} parent=11 // pred_check
          %p190 = pneg %p101
        $region22: #{forward.1} parent=11 // pred_check_branch
          %192 = sbr.rel (%p190) target = $region24
        $region23: #{forward.1} parent=11 // pred_region
          _
        $region24: #{forward.1} parent=11 // pred_fallthru
          _
        // Predicated region
        $region25: #{forward.1} parent=11 // pred_check
          %p193 = pneg %p122
        $region26: #{forward.1} parent=11 // pred_check_branch
          %195 = sbr.rel (%p193) target = $region28
        $region27: #{forward.1} parent=11 // pred_region
          _
        $region28: #{forward.1} parent=11 // pred_fallthru
          _
        // Predicated region
        $region29: #{forward.1} parent=11 // pred_check
          %p196 = pneg %p143
        $region30: #{forward.1} parent=11 // pred_check_branch
          %198 = sbr.rel (%p196) target = $region32
        $region31: #{forward.1} parent=11 // pred_region
          _
        $region32: #{forward.1} parent=11 // pred_fallthru
          _
      $region12: #{forward.1} parent=5 // pred_fallthru
        _
      %p199 = scmp.lt.s32.totalorder %s12, 3
      // Predicated region
      $region33: #{forward.1} parent=5 // pred_check
        %p200 = pneg %p199
      $region34: #{forward.1} parent=5 // pred_check_branch
        %202 = sbr.rel (%p200) target = $region36
      $region35: #{forward.1} parent=5 // pred_region
        // Predicated region
        $region37: #{forward.1} parent=35 // pred_check
          %p203 = pneg %p32
        $region38: #{forward.1} parent=35 // pred_check_branch
          %205 = sbr.rel (%p203) target = $region40
        $region39: #{forward.1} parent=35 // pred_region
          %s206 = sand.u32 %s22, 1
          %s207 = sand.u32 %s22, 1
          %s208 = smul.addr %s207, 48
          %s209 = scalar_lea.vmem [#allocation2], %s208
          %s210 = smul.addr %s12, 4
          %s211 = scalar_lea.vmem %s0, %s210
          // Predicated region
          $region41: #{forward.1} parent=39 // pred_check
            _
          $region42: #{forward.1} parent=39 // pred_check_branch
            %213 = sbr.rel (0) target = $region44
          $region43: #{forward.1} parent=39 // pred_region
            // Predicated region
            $region45: #{forward.1} parent=43 // pred_check
              _
            $region46: #{forward.1} parent=43 // pred_check_branch
              %215 = sbr.rel target = $region48
            $region47: #{forward.1} parent=43 // pred_region
              // Predicated region
              $region60: #{forward.1} parent=47 // pred_check
                _
              $region61: #{forward.1} parent=47 // pred_check_branch
                %252 = sbr.rel (0) target = $region63
              $region62: #{forward.1} parent=47 // pred_region
                loop: start=0, step=1, limit=1
                $region64: #{forward.1} parent=62 // loop_pre_header
                  _
                $region65: #{forward.1} parent=62 // loop_header
                  %s254 = sphi 0, %s258
                  %p255 = scmp.ge.s32.totalorder %s254, 1
                  %s259 = sphi %s211, %s211
                  %s260 = sphi %s209, %s209
                $region66: #{forward.1} parent=62 // loop_header_branch
                  %257 = sbr.rel (%p255) target = $region70
                $region67: #{forward.1} parent=62 // loop_body
                  _
                $region68: #{forward.1} parent=62 // loop_footer
                  %s258 = sadd.s32 1, %s254
                $region69: #{forward.1} parent=62 // loop_footer_branch
                  %253 = sbr.rel target = $region65
                $region70: #{forward.1} parent=62 // loop_exit
                  _
                loop: start=0, step=1, limit=1
                $region71: #{forward.1} parent=62 // loop_pre_header
                  _
                $region72: #{forward.1} parent=62 // loop_header
                  %s263 = sphi 0, %s267
                  %p264 = scmp.ge.s32.totalorder %s263, 1
                  %s268 = sphi %s211, %s211
                  %s269 = sphi %s209, %s209
                $region73: #{forward.1} parent=62 // loop_header_branch
                  %266 = sbr.rel (%p264) target = $region77
                $region74: #{forward.1} parent=62 // loop_body
                  %v270 = vld [vmem:[%s268] sm:$0xf]
                  %271 = vst [vmem:[%s269] sm:$0xf] %v270
                  %v272 = vld [vmem:[%s268 + $0xc] sm:$0xf]
                  %273 = vst [vmem:[%s269 + $0x4] sm:$0xf] %v272
                  %v274 = vld [vmem:[%s268 + $0x18] sm:$0xf]
                  %275 = vst [vmem:[%s269 + $0x8] sm:$0xf] %v274
                  %v276 = vld [vmem:[%s268 + $0x24] sm:$0xf]
                  %277 = vst [vmem:[%s269 + $0xc] sm:$0xf] %v276
                  %v278 = vld [vmem:[%s268 + $0x30] sm:$0xf]
                  %279 = vst [vmem:[%s269 + $0x10] sm:$0xf] %v278
                  %v280 = vld [vmem:[%s268 + $0x3c] sm:$0xf]
                  %281 = vst [vmem:[%s269 + $0x14] sm:$0xf] %v280
                  %v282 = vld [vmem:[%s268 + $0x48] sm:$0xf]
                  %283 = vst [vmem:[%s269 + $0x18] sm:$0xf] %v282
                  %v284 = vld [vmem:[%s268 + $0x54] sm:$0xf]
                  %285 = vst [vmem:[%s269 + $0x1c] sm:$0xf] %v284
                  %v286 = vld [vmem:[%s268 + $0x60] sm:$0xf]
                  %287 = vst [vmem:[%s269 + $0x20] sm:$0xf] %v286
                  %v288 = vld [vmem:[%s268 + $0x6c] sm:$0xf]
                  %289 = vst [vmem:[%s269 + $0x24] sm:$0xf] %v288
                  %v290 = vld [vmem:[%s268 + $0x78] sm:$0xf]
                  %291 = vst [vmem:[%s269 + $0x28] sm:$0xf] %v290
                  %v292 = vld [vmem:[%s268 + $0x84] sm:$0xf]
                  %293 = vst [vmem:[%s269 + $0x2c] sm:$0xf] %v292
                $region75: #{forward.1} parent=62 // loop_footer
                  %s267 = sadd.s32 1, %s263
                $region76: #{forward.1} parent=62 // loop_footer_branch
                  %262 = sbr.rel target = $region72
                $region77: #{forward.1} parent=62 // loop_exit
                  _
              $region63: #{forward.1} parent=47 // pred_fallthru
                _
            $region48: #{forward.1} parent=43 // pred_fallthru
              _
            // Predicated region
            $region49: #{forward.1} parent=43 // pred_check
              _
            $region50: #{forward.1} parent=43 // pred_check_branch
              %217 = sbr.rel (0) target = $region52
            $region51: #{forward.1} parent=43 // pred_region
              loop: start=0, step=1, limit=1
              $region53: #{forward.1} parent=51 // loop_pre_header
                _
              $region54: #{forward.1} parent=51 // loop_header
                %s220 = sphi 0, %s224
                %p221 = scmp.ge.s32.totalorder %s220, 1
                %s225 = sphi %s211, %s211
                %s226 = sphi %s209, %s209
              $region55: #{forward.1} parent=51 // loop_header_branch
                %223 = sbr.rel (%p221) target = $region59
              $region56: #{forward.1} parent=51 // loop_body
                %v227 = vld [vmem:[%s225] sm:$0xf]
                %228 = vst [vmem:[%s226] sm:$0xf] %v227
                %v229 = vld [vmem:[%s225 + $0xc] sm:$0xf]
                %230 = vst [vmem:[%s226 + $0x4] sm:$0xf] %v229
                %v231 = vld [vmem:[%s225 + $0x18] sm:$0xf]
                %232 = vst [vmem:[%s226 + $0x8] sm:$0xf] %v231
                %v233 = vld [vmem:[%s225 + $0x24] sm:$0xf]
                %234 = vst [vmem:[%s226 + $0xc] sm:$0xf] %v233
                %v235 = vld [vmem:[%s225 + $0x30] sm:$0xf]
                %236 = vst [vmem:[%s226 + $0x10] sm:$0xf] %v235
                %v237 = vld [vmem:[%s225 + $0x3c] sm:$0xf]
                %238 = vst [vmem:[%s226 + $0x14] sm:$0xf] %v237
                %v239 = vld [vmem:[%s225 + $0x48] sm:$0xf]
                %240 = vst [vmem:[%s226 + $0x18] sm:$0xf] %v239
                %v241 = vld [vmem:[%s225 + $0x54] sm:$0xf]
                %242 = vst [vmem:[%s226 + $0x1c] sm:$0xf] %v241
                %v243 = vld [vmem:[%s225 + $0x60] sm:$0xf]
                %244 = vst [vmem:[%s226 + $0x20] sm:$0xf] %v243
                %v245 = vld [vmem:[%s225 + $0x6c] sm:$0xf]
                %246 = vst [vmem:[%s226 + $0x24] sm:$0xf] %v245
                %v247 = vld [vmem:[%s225 + $0x78] sm:$0xf]
                %248 = vst [vmem:[%s226 + $0x28] sm:$0xf] %v247
                %v249 = vld [vmem:[%s225 + $0x84] sm:$0xf]
                %250 = vst [vmem:[%s226 + $0x2c] sm:$0xf] %v249
              $region57: #{forward.1} parent=51 // loop_footer
                %s224 = sadd.s32 1, %s220
              $region58: #{forward.1} parent=51 // loop_footer_branch
                %219 = sbr.rel target = $region54
              $region59: #{forward.1} parent=51 // loop_exit
                _
            $region52: #{forward.1} parent=43 // pred_fallthru
              _
          $region44: #{forward.1} parent=39 // pred_fallthru
            _
          %294 = vnop
        $region40: #{forward.1} parent=35 // pred_fallthru
          _
      $region36: #{forward.1} parent=5 // pred_fallthru
        _
      %p295 = scmp.le.s32.totalorder 1, %s12
      %p296 = scmp.lt.s32.totalorder %s12, 4
      %p297 = pnand %p295, %p296
      %p298 = pneg %p297
      // Predicated region
      $region78: #{forward.1} parent=5 // pred_check
        _
      $region79: #{forward.1} parent=5 // pred_check_branch
        %300 = sbr.rel (%p297) target = $region81
      $region80: #{forward.1} parent=5 // pred_region
        %s301 = ssub.s32 %s12, 1
        %s302 = sand.u32 %s25, 1
        %s303 = sand.u32 %s25, 1
        %s304 = smul.addr %s303, 48
        %s305 = scalar_lea.vmem [#allocation2], %s304
        // Predicated region
        $region82: #{forward.1} parent=80 // pred_check
          %p306 = pneg %p38
        $region83: #{forward.1} parent=80 // pred_check_branch
          %308 = sbr.rel (%p306) target = $region85
        $region84: #{forward.1} parent=80 // pred_region
          _
        $region85: #{forward.1} parent=80 // pred_fallthru
          _
        %s309 = sand.u32 %s25, 1
        %s310 = sand.u32 %s25, 1
        %s311 = smul.addr %s310, 48
        %s312 = scalar_lea.vmem [#allocation2], %s311
        %p313 = pneg %p38
        %p314 = pneg %p35
        %p315 = pneg %p59
        %p316 = pneg %p56
        %p317 = pneg %p80
        %p318 = pneg %p77
        %p319 = pneg %p101
        %p320 = pneg %p98
        %p321 = pneg %p122
        %p322 = pneg %p119
        %p323 = pneg %p143
        %p324 = pneg %p140
        %p325 = pneg %p169
        %p326 = pneg %p166
        %p327 = scmp.lt.s32.totalorder %s17, 2
        %s328 = scalar_select %p327, %s17, 2
        %s329 = scalar_lea.vmem %s6, %s328
        %p330 = scmp.lt.s32.totalorder %s17, 2
        %s331 = scalar_select %p330, %s17, 2
        %s332 = scalar_lea.vmem %s6, %s331
        %v334 = vld [vmem:[%s305] sm:$0xf]
        %v335 = vld [vmem:[%s305 + $0x4] sm:$0xf]
        %v336 = vld [vmem:[%s305 + $0x8] sm:$0xf]
        %v337 = vld [vmem:[%s305 + $0xc] sm:$0xf]
        %v338 = vld [vmem:[%s305 + $0x10] sm:$0xf]
        %v339 = vld [vmem:[%s305 + $0x14] sm:$0xf]
        %v340 = vld [vmem:[%s305 + $0x18] sm:$0xf]
        %v341 = vld [vmem:[%s305 + $0x1c] sm:$0xf]
        %v342 = vld [vmem:[%s305 + $0x20] sm:$0xf]
        %v343 = vld [vmem:[%s305 + $0x24] sm:$0xf]
        %v344 = vld [vmem:[%s305 + $0x28] sm:$0xf]
        %v345 = vld [vmem:[%s305 + $0x2c] sm:$0xf]
        %v346 = vld [vmem:[%s1] sm:$0xf]
        %v347 = vld [vmem:[%s1 + $0x4] sm:$0xf]
        %v348 = vld [vmem:[%s1 + $0x8] sm:$0xf]
        %v349 = vld [vmem:[%s1 + $0xc] sm:$0xf]
        %v350 = vld [vmem:[%s1 + $0x10] sm:$0xf]
        %v351 = vld [vmem:[%s1 + $0x14] sm:$0xf]
        %v352 = vld [vmem:[%s1 + $0x18] sm:$0xf]
        %v353 = vld [vmem:[%s1 + $0x1c] sm:$0xf]
        %v354 = vld [vmem:[%s1 + $0x20] sm:$0xf]
        %v355 = vld [vmem:[%s1 + $0x24] sm:$0xf]
        %v356 = vld [vmem:[%s1 + $0x28] sm:$0xf]
        %v357 = vld [vmem:[%s1 + $0x2c] sm:$0xf]
        %v370 = vunpack.c.l.b16 %v346
        %v371 = vunpack.c.l.b16 %v347
        %v372 = vunpack.c.l.b16 %v348
        %v373 = vunpack.c.l.b16 %v349
        %v374 = vunpack.c.l.b16 %v350
        %v375 = vunpack.c.l.b16 %v351
        %v376 = vunpack.c.l.b16 %v352
        %v377 = vunpack.c.l.b16 %v353
        %v378 = vunpack.c.l.b16 %v354
        %v379 = vunpack.c.l.b16 %v355
        %v380 = vunpack.c.l.b16 %v356
        %v381 = vunpack.c.l.b16 %v357
        %v382 = vpack.c.b16 %v371, %v370
        %v383 = vpack.c.b16 %v373, %v372
        %v384 = vpack.c.b16 %v375, %v374
        %v385 = vpack.c.b16 %v377, %v376
        %v386 = vpack.c.b16 %v379, %v378
        %v387 = vpack.c.b16 %v381, %v380
        %v400 = vunpack.c.l.b16 %v334
        %v401 = vunpack.c.l.b16 %v335
        %v402 = vunpack.c.l.b16 %v336
        %v403 = vunpack.c.l.b16 %v337
        %v404 = vunpack.c.l.b16 %v338
        %v405 = vunpack.c.l.b16 %v339
        %v406 = vunpack.c.l.b16 %v340
        %v407 = vunpack.c.l.b16 %v341
        %v408 = vunpack.c.l.b16 %v342
        %v409 = vunpack.c.l.b16 %v343
        %v410 = vunpack.c.l.b16 %v344
        %v411 = vunpack.c.l.b16 %v345
        %v412 = vpack.c.b16 %v401, %v400
        %v413 = vpack.c.b16 %v403, %v402
        %v414 = vpack.c.b16 %v405, %v404
        %v415 = vpack.c.b16 %v407, %v406
        %v416 = vpack.c.b16 %v409, %v408
        %v417 = vpack.c.b16 %v411, %v410
        %vm424 = vcmask 785408
        %v426 = vsel %vm424, %v382, 0
        %v429 = vsel %vm424, %v383, 0
        %v432 = vsel %vm424, %v384, 0
        %v435 = vsel %vm424, %v385, 0
        %v438 = vsel %vm424, %v386, 0
        %v441 = vsel %vm424, %v387, 0
        %443 = vmatprep.subr.bf16.mxu0 0
        %444 = vmatpush1.bf16.msra.mxu0 %v412
        %445 = vmatprep.subr.bf16.mxu0 0
        %446 = vmatpush1.bf16.msra.mxu0 %v413
        %447 = vmatprep.subr.bf16.mxu0 0
        %448 = vmatpush1.bf16.msra.mxu0 %v414
        %449 = vmatprep.subr.bf16.mxu0 0
        %450 = vmatpush1.bf16.msra.mxu0 %v415
        %451 = vmatprep.subr.bf16.mxu0 0
        %452 = vmatpush1.bf16.msra.mxu0 %v416
        %453 = vmatprep.subr.bf16.mxu0 0
        %454 = vmatpush1.bf16.msra.mxu0 %v417
        %455 = vmatprep.subr.bf16.mxu0 0
        %456 = vmatpush1.bf16.msra.mxu0 0
        %457 = vmatprep.subr.bf16.mxu0 0
        %458 = vmatpush1.bf16.msra.mxu0 0
        %459 = vmatprep.subr.bf16.mxu0 0
        %460 = vmatpush1.bf16.msra.mxu0 0
        %461 = vmatprep.subr.bf16.mxu0 0
        %462 = vmatpush1.bf16.msra.mxu0 0
        %463 = vmatprep.subr.bf16.mxu0 0
        %464 = vmatpush1.bf16.msra.mxu0 0
        %465 = vmatprep.subr.bf16.mxu0 0
        %466 = vmatpush1.bf16.msra.mxu0 0
        %467 = vmatprep.subr.bf16.mxu0 0
        %468 = vmatpush1.bf16.msra.mxu0 0
        %469 = vmatprep.subr.bf16.mxu0 0
        %470 = vmatpush1.bf16.msra.mxu0 0
        %471 = vmatprep.subr.bf16.mxu0 0
        %472 = vmatpush1.bf16.msra.mxu0 0
        %473 = vmatprep.subr.bf16.mxu0 0
        %474 = vmatpush1.bf16.msra.mxu0 0
        %475 = vmatprep.mubr.bf16.mxu0 0
        %476 = vmatmul.mubr.bf16.gmra.mrb[0].mxu0 %v426
        %v477 = vpop.f32.mrb[0].mxu0
        %v478 = vadd.f32 0.0, %v477
        %v479 = vpop.f32.mrb[0].mxu0
        %v480 = vpop.f32.mrb[0].mxu0
        %v481 = vadd.f32 0.0, %v480
        %v482 = vpop.f32.mrb[0].mxu0
        %483 = vmatprep.mubr.bf16.mxu0 0
        %484 = vmatmul.mubr.bf16.gmra.mrb[0].mxu0 %v429
        %v485 = vpop.f32.mrb[0].mxu0
        %v486 = vadd.f32 0.0, %v485
        %v487 = vpop.f32.mrb[0].mxu0
        %v488 = vpop.f32.mrb[0].mxu0
        %v489 = vadd.f32 0.0, %v488
        %v490 = vpop.f32.mrb[0].mxu0
        %491 = vmatprep.mubr.bf16.mxu0 0
        %492 = vmatmul.mubr.bf16.gmra.mrb[0].mxu0 %v432
        %v493 = vpop.f32.mrb[0].mxu0
        %v494 = vadd.f32 0.0, %v493
        %v495 = vpop.f32.mrb[0].mxu0
        %v496 = vpop.f32.mrb[0].mxu0
        %v497 = vadd.f32 0.0, %v496
        %v498 = vpop.f32.mrb[0].mxu0
        %499 = vmatprep.mubr.bf16.mxu0 0
        %500 = vmatmul.mubr.bf16.gmra.mrb[0].mxu0 %v435
        %v501 = vpop.f32.mrb[0].mxu0
        %v502 = vadd.f32 0.0, %v501
        %v503 = vpop.f32.mrb[0].mxu0
        %v504 = vpop.f32.mrb[0].mxu0
        %v505 = vadd.f32 0.0, %v504
        %v506 = vpop.f32.mrb[0].mxu0
        %507 = vmatprep.mubr.bf16.mxu0 0
        %508 = vmatmul.mubr.bf16.gmra.mrb[0].mxu0 %v438
        %v509 = vpop.f32.mrb[0].mxu0
        %v510 = vadd.f32 0.0, %v509
        %v511 = vpop.f32.mrb[0].mxu0
        %v512 = vpop.f32.mrb[0].mxu0
        %v513 = vadd.f32 0.0, %v512
        %v514 = vpop.f32.mrb[0].mxu0
        %515 = vmatprep.mubr.bf16.mxu0 0
        %516 = vmatmul.mubr.bf16.gmra.mrb[0].mxu0 %v441
        %v517 = vpop.f32.mrb[0].mxu0
        %v518 = vadd.f32 0.0, %v517
        %v519 = vpop.f32.mrb[0].mxu0
        %v520 = vpop.f32.mrb[0].mxu0
        %v521 = vadd.f32 0.0, %v520
        %v522 = vpop.f32.mrb[0].mxu0
        %523 = vdwg.mxu0
        %v524 = vmax.f32 %v478, 0.0
        %v525 = vmax.f32 %v481, 0.0
        %v526 = vmax.f32 %v486, 0.0
        %v527 = vmax.f32 %v489, 0.0
        %v528 = vmax.f32 %v494, 0.0
        %v529 = vmax.f32 %v497, 0.0
        %v530 = vmax.f32 %v502, 0.0
        %v531 = vmax.f32 %v505, 0.0
        %v532 = vmax.f32 %v510, 0.0
        %v533 = vmax.f32 %v513, 0.0
        %v534 = vmax.f32 %v518, 0.0
        %v535 = vmax.f32 %v521, 0.0
        %v536 = vpack.c.bf16 %v525, %v524
        %v537 = vpack.c.bf16 %v527, %v526
        %v538 = vpack.c.bf16 %v529, %v528
        %v539 = vpack.c.bf16 %v531, %v530
        %v540 = vpack.c.bf16 %v533, %v532
        %v541 = vpack.c.bf16 %v535, %v534
        %v542 = vld [vmem:[%s2] sm:$0xf]
        %v543 = vld [vmem:[%s2 + $0x4] sm:$0xf]
        %v544 = vld [vmem:[%s2 + $0x8] sm:$0xf]
        %v545 = vld [vmem:[%s2 + $0xc] sm:$0xf]
        %v546 = vld [vmem:[%s2 + $0x10] sm:$0xf]
        %v547 = vld [vmem:[%s2 + $0x14] sm:$0xf]
        %v548 = vld [vmem:[%s2 + $0x18] sm:$0xf]
        %v549 = vld [vmem:[%s2 + $0x1c] sm:$0xf]
        %v550 = vld [vmem:[%s2 + $0x20] sm:$0xf]
        %v551 = vld [vmem:[%s2 + $0x24] sm:$0xf]
        %v552 = vld [vmem:[%s2 + $0x28] sm:$0xf]
        %v553 = vld [vmem:[%s2 + $0x2c] sm:$0xf]
        %v566 = vunpack.c.l.b16 %v542
        %v567 = vunpack.c.l.b16 %v543
        %v568 = vunpack.c.l.b16 %v544
        %v569 = vunpack.c.l.b16 %v545
        %v570 = vunpack.c.l.b16 %v546
        %v571 = vunpack.c.l.b16 %v547
        %v572 = vunpack.c.l.b16 %v548
        %v573 = vunpack.c.l.b16 %v549
        %v574 = vunpack.c.l.b16 %v550
        %v575 = vunpack.c.l.b16 %v551
        %v576 = vunpack.c.l.b16 %v552
        %v577 = vunpack.c.l.b16 %v553
        %v578 = vpack.c.b16 %v567, %v566
        %v579 = vpack.c.b16 %v569, %v568
        %v580 = vpack.c.b16 %v571, %v570
        %v581 = vpack.c.b16 %v573, %v572
        %v582 = vpack.c.b16 %v575, %v574
        %v583 = vpack.c.b16 %v577, %v576
        %v585 = vsel %vm424, %v578, 0
        %v588 = vsel %vm424, %v579, 0
        %v591 = vsel %vm424, %v580, 0
        %v594 = vsel %vm424, %v581, 0
        %v597 = vsel %vm424, %v582, 0
        %v600 = vsel %vm424, %v583, 0
        %602 = vmatprep.subr.bf16.mxu0 0
        %603 = vmatpush1.bf16.msra.mxu0 %v536
        %604 = vmatprep.subr.bf16.mxu0 0
        %605 = vmatpush1.bf16.msra.mxu0 %v537
        %606 = vmatprep.subr.bf16.mxu0 0
        %607 = vmatpush1.bf16.msra.mxu0 %v538
        %608 = vmatprep.subr.bf16.mxu0 0
        %609 = vmatpush1.bf16.msra.mxu0 %v539
        %610 = vmatprep.subr.bf16.mxu0 0
        %611 = vmatpush1.bf16.msra.mxu0 %v540
        %612 = vmatprep.subr.bf16.mxu0 0
        %613 = vmatpush1.bf16.msra.mxu0 %v541
        %614 = vmatprep.subr.bf16.mxu0 0
        %615 = vmatpush1.bf16.msra.mxu0 0
        %616 = vmatprep.subr.bf16.mxu0 0
        %617 = vmatpush1.bf16.msra.mxu0 0
        %618 = vmatprep.subr.bf16.mxu0 0
        %619 = vmatpush1.bf16.msra.mxu0 0
        %620 = vmatprep.subr.bf16.mxu0 0
        %621 = vmatpush1.bf16.msra.mxu0 0
        %622 = vmatprep.subr.bf16.mxu0 0
        %623 = vmatpush1.bf16.msra.mxu0 0
        %624 = vmatprep.subr.bf16.mxu0 0
        %625 = vmatpush1.bf16.msra.mxu0 0
        %626 = vmatprep.subr.bf16.mxu0 0
        %627 = vmatpush1.bf16.msra.mxu0 0
        %628 = vmatprep.subr.bf16.mxu0 0
        %629 = vmatpush1.bf16.msra.mxu0 0
        %630 = vmatprep.subr.bf16.mxu0 0
        %631 = vmatpush1.bf16.msra.mxu0 0
        %632 = vmatprep.subr.bf16.mxu0 0
        %633 = vmatpush1.bf16.msra.mxu0 0
        %634 = vmatprep.mubr.bf16.mxu0 0
        %635 = vmatmul.mubr.bf16.gmra.mrb[0].mxu0 %v585
        %v636 = vpop.f32.mrb[0].mxu0
        %v637 = vadd.f32 0.0, %v636
        %v638 = vpop.f32.mrb[0].mxu0
        %v639 = vpop.f32.mrb[0].mxu0
        %v640 = vadd.f32 0.0, %v639
        %v641 = vpop.f32.mrb[0].mxu0
        %642 = vmatprep.mubr.bf16.mxu0 0
        %643 = vmatmul.mubr.bf16.gmra.mrb[0].mxu0 %v588
        %v644 = vpop.f32.mrb[0].mxu0
        %v645 = vadd.f32 0.0, %v644
        %v646 = vpop.f32.mrb[0].mxu0
        %v647 = vpop.f32.mrb[0].mxu0
        %v648 = vadd.f32 0.0, %v647
        %v649 = vpop.f32.mrb[0].mxu0
        %650 = vmatprep.mubr.bf16.mxu0 0
        %651 = vmatmul.mubr.bf16.gmra.mrb[0].mxu0 %v591
        %v652 = vpop.f32.mrb[0].mxu0
        %v653 = vadd.f32 0.0, %v652
        %v654 = vpop.f32.mrb[0].mxu0
        %v655 = vpop.f32.mrb[0].mxu0
        %v656 = vadd.f32 0.0, %v655
        %v657 = vpop.f32.mrb[0].mxu0
        %658 = vmatprep.mubr.bf16.mxu0 0
        %659 = vmatmul.mubr.bf16.gmra.mrb[0].mxu0 %v594
        %v660 = vpop.f32.mrb[0].mxu0
        %v661 = vadd.f32 0.0, %v660
        %v662 = vpop.f32.mrb[0].mxu0
        %v663 = vpop.f32.mrb[0].mxu0
        %v664 = vadd.f32 0.0, %v663
        %v665 = vpop.f32.mrb[0].mxu0
        %666 = vmatprep.mubr.bf16.mxu0 0
        %667 = vmatmul.mubr.bf16.gmra.mrb[0].mxu0 %v597
        %v668 = vpop.f32.mrb[0].mxu0
        %v669 = vadd.f32 0.0, %v668
        %v670 = vpop.f32.mrb[0].mxu0
        %v671 = vpop.f32.mrb[0].mxu0
        %v672 = vadd.f32 0.0, %v671
        %v673 = vpop.f32.mrb[0].mxu0
        %674 = vmatprep.mubr.bf16.mxu0 0
        %675 = vmatmul.mubr.bf16.gmra.mrb[0].mxu0 %v600
        %v676 = vpop.f32.mrb[0].mxu0
        %v677 = vadd.f32 0.0, %v676
        %v678 = vpop.f32.mrb[0].mxu0
        %v679 = vpop.f32.mrb[0].mxu0
        %v680 = vadd.f32 0.0, %v679
        %v681 = vpop.f32.mrb[0].mxu0
        %682 = vdwg.mxu0
        %v683 = vmax.f32 %v637, 0.0
        %v684 = vmax.f32 %v640, 0.0
        %v685 = vmax.f32 %v645, 0.0
        %v686 = vmax.f32 %v648, 0.0
        %v687 = vmax.f32 %v653, 0.0
        %v688 = vmax.f32 %v656, 0.0
        %v689 = vmax.f32 %v661, 0.0
        %v690 = vmax.f32 %v664, 0.0
        %v691 = vmax.f32 %v669, 0.0
        %v692 = vmax.f32 %v672, 0.0
        %v693 = vmax.f32 %v677, 0.0
        %v694 = vmax.f32 %v680, 0.0
        %v695 = vpack.c.bf16 %v684, %v683
        %v696 = vpack.c.bf16 %v686, %v685
        %v697 = vpack.c.bf16 %v688, %v687
        %v698 = vpack.c.bf16 %v690, %v689
        %v699 = vpack.c.bf16 %v692, %v691
        %v700 = vpack.c.bf16 %v694, %v693
        %v701 = vld [vmem:[%s3] sm:$0xf]
        %v702 = vld [vmem:[%s3 + $0x4] sm:$0xf]
        %v703 = vld [vmem:[%s3 + $0x8] sm:$0xf]
        %v704 = vld [vmem:[%s3 + $0xc] sm:$0xf]
        %v705 = vld [vmem:[%s3 + $0x10] sm:$0xf]
        %v706 = vld [vmem:[%s3 + $0x14] sm:$0xf]
        %v713 = vunpack.c.l.b16 %v701
        %v714 = vunpack.c.l.b16 %v702
        %v715 = vunpack.c.l.b16 %v703
        %v716 = vunpack.c.l.b16 %v704
        %v717 = vunpack.c.l.b16 %v705
        %v718 = vunpack.c.l.b16 %v706
        %v719 = vpack.c.b16 %v714, %v713
        %v720 = vpack.c.b16 %v716, %v715
        %v721 = vpack.c.b16 %v718, %v717
        %v723 = vsel %vm424, %v719, 0
        %v726 = vsel %vm424, %v720, 0
        %v729 = vsel %vm424, %v721, 0
        %731 = vmatprep.subr.bf16.mxu0 0
        %732 = vmatpush1.bf16.msra.mxu0 %v695
        %733 = vmatprep.subr.bf16.mxu0 0
        %734 = vmatpush1.bf16.msra.mxu0 %v696
        %735 = vmatprep.subr.bf16.mxu0 0
        %736 = vmatpush1.bf16.msra.mxu0 %v697
        %737 = vmatprep.subr.bf16.mxu0 0
        %738 = vmatpush1.bf16.msra.mxu0 %v698
        %739 = vmatprep.subr.bf16.mxu0 0
        %740 = vmatpush1.bf16.msra.mxu0 %v699
        %741 = vmatprep.subr.bf16.mxu0 0
        %742 = vmatpush1.bf16.msra.mxu0 %v700
        %743 = vmatprep.subr.bf16.mxu0 0
        %744 = vmatpush1.bf16.msra.mxu0 0
        %745 = vmatprep.subr.bf16.mxu0 0
        %746 = vmatpush1.bf16.msra.mxu0 0
        %747 = vmatprep.subr.bf16.mxu0 0
        %748 = vmatpush1.bf16.msra.mxu0 0
        %749 = vmatprep.subr.bf16.mxu0 0
        %750 = vmatpush1.bf16.msra.mxu0 0
        %751 = vmatprep.subr.bf16.mxu0 0
        %752 = vmatpush1.bf16.msra.mxu0 0
        %753 = vmatprep.subr.bf16.mxu0 0
        %754 = vmatpush1.bf16.msra.mxu0 0
        %755 = vmatprep.subr.bf16.mxu0 0
        %756 = vmatpush1.bf16.msra.mxu0 0
        %757 = vmatprep.subr.bf16.mxu0 0
        %758 = vmatpush1.bf16.msra.mxu0 0
        %759 = vmatprep.subr.bf16.mxu0 0
        %760 = vmatpush1.bf16.msra.mxu0 0
        %761 = vmatprep.subr.bf16.mxu0 0
        %762 = vmatpush1.bf16.msra.mxu0 0
        %763 = vmatprep.mubr.bf16.mxu0 0
        %764 = vmatmul.mubr.bf16.gmra.mrb[0].mxu0 %v723
        %v765 = vpop.f32.mrb[0].mxu0
        %v766 = vadd.f32 0.0, %v765
        %v767 = vpop.f32.mrb[0].mxu0
        %v768 = vpop.f32.mrb[0].mxu0
        %v769 = vadd.f32 0.0, %v768
        %v770 = vpop.f32.mrb[0].mxu0
        %771 = vmatprep.mubr.bf16.mxu0 0
        %772 = vmatmul.mubr.bf16.gmra.mrb[0].mxu0 %v726
        %v773 = vpop.f32.mrb[0].mxu0
        %v774 = vadd.f32 0.0, %v773
        %v775 = vpop.f32.mrb[0].mxu0
        %v776 = vpop.f32.mrb[0].mxu0
        %v777 = vadd.f32 0.0, %v776
        %v778 = vpop.f32.mrb[0].mxu0
        %779 = vmatprep.mubr.bf16.mxu0 0
        %780 = vmatmul.mubr.bf16.gmra.mrb[0].mxu0 %v729
        %v781 = vpop.f32.mrb[0].mxu0
        %v782 = vadd.f32 0.0, %v781
        %v783 = vpop.f32.mrb[0].mxu0
        %v784 = vpop.f32.mrb[0].mxu0
        %v785 = vadd.f32 0.0, %v784
        %v786 = vpop.f32.mrb[0].mxu0
        %787 = vdwg.mxu0
        %v788 = vmax.f32 %v766, 0.0
        %v789 = vmax.f32 %v769, 0.0
        %v790 = vmax.f32 %v774, 0.0
        %v791 = vmax.f32 %v777, 0.0
        %v792 = vmax.f32 %v782, 0.0
        %v793 = vmax.f32 %v785, 0.0
        %v794 = vpack.c.bf16 %v789, %v788
        %v795 = vpack.c.bf16 %v791, %v790
        %v796 = vpack.c.bf16 %v793, %v792
        %v797 = vld [vmem:[%s4] sm:$0xf]
        %v798 = vld [vmem:[%s4 + $0x4] sm:$0xf]
        %v801 = vunpack.c.l.b16 %v797
        %v802 = vunpack.c.l.b16 %v798
        %v803 = vpack.c.b16 %v802, %v801
        %vm804 = vcmask 392192
        %v806 = vsel %vm804, %v803, 0
        %808 = vmatprep.subr.bf16.mxu0 0
        %809 = vmatpush1.bf16.msra.mxu0 %v794
        %810 = vmatprep.subr.bf16.mxu0 0
        %811 = vmatpush1.bf16.msra.mxu0 %v795
        %812 = vmatprep.subr.bf16.mxu0 0
        %813 = vmatpush1.bf16.msra.mxu0 %v796
        %814 = vmatprep.subr.bf16.mxu0 0
        %815 = vmatpush1.bf16.msra.mxu0 0
        %816 = vmatprep.subr.bf16.mxu0 0
        %817 = vmatpush1.bf16.msra.mxu0 0
        %818 = vmatprep.subr.bf16.mxu0 0
        %819 = vmatpush1.bf16.msra.mxu0 0
        %820 = vmatprep.subr.bf16.mxu0 0
        %821 = vmatpush1.bf16.msra.mxu0 0
        %822 = vmatprep.subr.bf16.mxu0 0
        %823 = vmatpush1.bf16.msra.mxu0 0
        %824 = vmatprep.subr.bf16.mxu0 0
        %825 = vmatpush1.bf16.msra.mxu0 0
        %826 = vmatprep.subr.bf16.mxu0 0
        %827 = vmatpush1.bf16.msra.mxu0 0
        %828 = vmatprep.subr.bf16.mxu0 0
        %829 = vmatpush1.bf16.msra.mxu0 0
        %830 = vmatprep.subr.bf16.mxu0 0
        %831 = vmatpush1.bf16.msra.mxu0 0
        %832 = vmatprep.subr.bf16.mxu0 0
        %833 = vmatpush1.bf16.msra.mxu0 0
        %834 = vmatprep.subr.bf16.mxu0 0
        %835 = vmatpush1.bf16.msra.mxu0 0
        %836 = vmatprep.subr.bf16.mxu0 0
        %837 = vmatpush1.bf16.msra.mxu0 0
        %838 = vmatprep.subr.bf16.mxu0 0
        %839 = vmatpush1.bf16.msra.mxu0 0
        %840 = vmatprep.mubr.bf16.mxu0 0
        %841 = vmatmul.mubr.bf16.gmra.mrb[0].mxu0 %v806
        %v842 = vpop.f32.mrb[0].mxu0
        %v843 = vadd.f32 0.0, %v842
        %v844 = vpop.f32.mrb[0].mxu0
        %v845 = vpop.f32.mrb[0].mxu0
        %v846 = vadd.f32 0.0, %v845
        %v847 = vpop.f32.mrb[0].mxu0
        %848 = vdwg.mxu0
        %v849 = vmax.f32 %v843, 0.0
        %v850 = vmax.f32 %v846, 0.0
        %v851 = vpack.c.bf16 %v850, %v849
        %v852 = vld [vmem:[%s5] sm:$0x1]
        %vm853 = vcmask 130048
        %v855 = vsel %vm853, %v852, 0
        %857 = vmatprep.subr.bf16.mxu0 0
        %858 = vmatpush1.bf16.msra.mxu0 %v851
        %859 = vmatprep.subr.bf16.mxu0 0
        %860 = vmatpush1.bf16.msra.mxu0 0
        %861 = vmatprep.subr.bf16.mxu0 0
        %862 = vmatpush1.bf16.msra.mxu0 0
        %863 = vmatprep.subr.bf16.mxu0 0
        %864 = vmatpush1.bf16.msra.mxu0 0
        %865 = vmatprep.subr.bf16.mxu0 0
        %866 = vmatpush1.bf16.msra.mxu0 0
        %867 = vmatprep.subr.bf16.mxu0 0
        %868 = vmatpush1.bf16.msra.mxu0 0
        %869 = vmatprep.subr.bf16.mxu0 0
        %870 = vmatpush1.bf16.msra.mxu0 0
        %871 = vmatprep.subr.bf16.mxu0 0
        %872 = vmatpush1.bf16.msra.mxu0 0
        %873 = vmatprep.subr.bf16.mxu0 0
        %874 = vmatpush1.bf16.msra.mxu0 0
        %875 = vmatprep.subr.bf16.mxu0 0
        %876 = vmatpush1.bf16.msra.mxu0 0
        %877 = vmatprep.subr.bf16.mxu0 0
        %878 = vmatpush1.bf16.msra.mxu0 0
        %879 = vmatprep.subr.bf16.mxu0 0
        %880 = vmatpush1.bf16.msra.mxu0 0
        %881 = vmatprep.subr.bf16.mxu0 0
        %882 = vmatpush1.bf16.msra.mxu0 0
        %883 = vmatprep.subr.bf16.mxu0 0
        %884 = vmatpush1.bf16.msra.mxu0 0
        %885 = vmatprep.subr.bf16.mxu0 0
        %886 = vmatpush1.bf16.msra.mxu0 0
        %887 = vmatprep.subr.bf16.mxu0 0
        %888 = vmatpush1.bf16.msra.mxu0 0
        %889 = vmatprep.mubr.bf16.mxu0 0
        %890 = vmatmul.mubr.bf16.gmra.mrb[0].mxu0 %v855
        %v891 = vpop.f32.mrb[0].mxu0
        %v892 = vadd.f32 0.0, %v891
        %v893 = vpop.f32.mrb[0].mxu0
        %v894 = vpop.f32.mrb[0].mxu0
        %v895 = vpop.f32.mrb[0].mxu0
        %896 = vdwg.mxu0
        %v897 = vxor.u32 %v892, 2147483648
        %v898 = vmul.f32 %v897, 1.442695
        %v899 = vpow.pop %v898
        %v900 = vadd.f32 %v899, 1.0
        %v901 = vrcp.pop %v900
        %v902 = vmul.f32 1.0, %v901
        %903 = vst [vmem:[%s332] sm:$0x1] %v902
        %p904 = scmp.lt.s32.totalorder %s17, 2
        %s905 = scalar_select %p904, %s17, 2
        %s906 = scalar_lea.vmem %s6, %s905
        // Predicated region
        $region86: #{forward.1} parent=80 // pred_check
          %p907 = pneg %p166
        $region87: #{forward.1} parent=80 // pred_check_branch
          %909 = sbr.rel (%p907) target = $region89
        $region88: #{forward.1} parent=80 // pred_region
          _
        $region89: #{forward.1} parent=80 // pred_fallthru
          _
      $region81: #{forward.1} parent=5 // pred_fallthru
        _
      %p910 = scmp.le.s32.totalorder 2, %s12
      // Predicated region
      $region90: #{forward.1} parent=5 // pred_check
        %p911 = pneg %p910
      $region91: #{forward.1} parent=5 // pred_check_branch
        %913 = sbr.rel (%p911) target = $region93
      $region92: #{forward.1} parent=5 // pred_region
        %s914 = ssub.s32 %s12, 2
        // Predicated region
        $region94: #{forward.1} parent=92 // pred_check
          %p915 = pneg %p172
        $region95: #{forward.1} parent=92 // pred_check_branch
          %917 = sbr.rel (%p915) target = $region97
        $region96: #{forward.1} parent=92 // pred_region
          %p918 = scmp.lt.s32.totalorder %s18, 2
          %s919 = scalar_select %p918, %s18, 2
          %s920 = scalar_lea.vmem %s6, %s919
        $region97: #{forward.1} parent=92 // pred_fallthru
          _
      $region93: #{forward.1} parent=5 // pred_fallthru
        _
    $region6: #{forward.1} parent=1 // loop_footer
      %s16 = sadd.s32 1, %s12
    $region7: #{forward.1} parent=1 // loop_footer_branch
      %11 = sbr.rel target = $region3
    $region8: #{forward.1} parent=1 // loop_exit
      _

</llo_original>
